<compile_context>
chip_gen: v5e
topology: v5e:2x2
jax: 0.10.0
libtpu: 0.0.40
codegen_flags: <defaults>
</compile_context>

<pallas_src>
import functools
import math

import jax
import jax.numpy as jnp
from jax import lax
from jax.experimental import pallas as pl
from jax.experimental.pallas import tpu as pltpu


def _round_up(x, m):
    return ((x + m - 1) // m) * m


def actor_kernel(xT_ref, w0_ref, w1_ref, w2_ref, c_ref, out_ref, *, offs, dims):
    """Lane-dense MLP actor forward (batch on lanes).

    xT_ref : [obs_dim, tile_b]            observations, transposed
    w*_ref : [out_features, in_features]  PyTorch nn.Linear weight layout
    c_ref  : [n_rows, 1]                  packed column constants (b0,b1,b2,half,mid)
    out_ref: [act_dim, tile_b]            rescaled actions, transposed
    """
    o_b0, o_b1, o_b2, o_half, o_mid = offs
    h0_dim, h1_dim, act_dim = dims

    xT = xT_ref[...]

    b0 = c_ref[o_b0:o_b0 + h0_dim, :]
    b1 = c_ref[o_b1:o_b1 + h1_dim, :]
    b2 = c_ref[o_b2:o_b2 + act_dim, :]
    half = c_ref[o_half:o_half + act_dim, :]
    mid = c_ref[o_mid:o_mid + act_dim, :]

    # hidden layer 0:  h0^T = W0 @ x^T + b0  (f32 accumulation on MXU), ReLU
    h0 = lax.dot_general(w0_ref[...], xT, (((1,), (0,)), ((), ())),
                         preferred_element_type=jnp.float32) + b0
    h0 = jnp.maximum(h0, 0.0)

    # hidden layer 1
    h1 = lax.dot_general(w1_ref[...], h0.astype(w1_ref.dtype),
                         (((1,), (0,)), ((), ())),
                         preferred_element_type=jnp.float32) + b1
    h1 = jnp.maximum(h1, 0.0)

    # output layer + tanh (EUP, f32)
    a = lax.dot_general(w2_ref[...], h1.astype(w2_ref.dtype),
                        (((1,), (0,)), ((), ())),
                        preferred_element_type=jnp.float32) + b2
    a = jnp.tanh(a)

    # tanh output is already in (-1, 1) -> reference clamp(-1, 1) is dead work.
    # low + (a+1)*0.5*(high-low) == a*half + mid  (single lane-dense FMA)
    out_ref[...] = a * half + mid

    # TODO(synk): deterministic=False adds clamp(randn(act_dim)*noise, -0.5, 0.5)
    # exploration noise before the clamp; only deterministic=True is implemented.


def mlp_actor_forward(obs, params, low, high, *, compute_dtype=jnp.float32,
                      max_tile_b=1024, target_steps=8):
    """obs: [B, obs_dim] f32.  params: list of (W[in,out], b[1,out]) f32.
    low/high: [1, act_dim] f32.  Returns [B, act_dim] f32."""
    (w0, b0), (w1, b1), (w2, b2) = params
    B, obs_dim = obs.shape
    h0_dim = w0.shape[1]
    h1_dim = w1.shape[1]
    act_dim = w2.shape[1]

    # ---- fold the action-space rescale into per-model column constants ----
    low_c = low.astype(jnp.float32).reshape(act_dim, 1)
    high_c = high.astype(jnp.float32).reshape(act_dim, 1)
    half = 0.5 * (high_c - low_c)
    mid = low_c + half

    # ---- pack biases + rescale constants into one column operand ----------
    # (each segment padded so it starts on an 8-row / sublane boundary)
    pieces = [b0.reshape(h0_dim, 1).astype(jnp.float32),
              b1.reshape(h1_dim, 1).astype(jnp.float32),
              b2.reshape(act_dim, 1).astype(jnp.float32),
              half, mid]
    offs, rows, off = [], [], 0
    for p in pieces:
        offs.append(off)
        seg = _round_up(p.shape[0], 8)
        rows.append(jnp.pad(p, ((0, seg - p.shape[0]), (0, 0))))
        off += seg
    consts = jnp.concatenate(rows, axis=0)           # [n_rows, 1] f32

    # ---- lane-dense layout: batch maps to lanes ----------------------------
    # weights in PyTorch [out, in] layout so the kernel computes W @ x^T
    w0_t = w0.T.astype(compute_dtype)
    w1_t = w1.T.astype(compute_dtype)
    w2_t = w2.T.astype(compute_dtype)

    LANE = 128
    tile_b = _round_up(max(1, -(-B // target_steps)), LANE)
    tile_b = max(LANE, min(tile_b, max_tile_b))
    B_pad = _round_up(B, tile_b)

    xT = obs.astype(compute_dtype).T                 # [obs_dim, B]
    if B_pad != B:
        xT = jnp.pad(xT, ((0, 0), (0, B_pad - B)))

    grid = (B_pad // tile_b,)

    # advisory cost hint (consistently on the padded batch)
    flops = 2 * B_pad * (obs_dim * h0_dim + h0_dim * h1_dim + h1_dim * act_dim)
    bytes_accessed = (
        xT.size * xT.dtype.itemsize
        + B_pad * act_dim * 4
        + sum(a.size * a.dtype.itemsize for a in (w0_t, w1_t, w2_t, consts)))
    cost = pl.CostEstimate(flops=flops, transcendentals=B_pad * act_dim,
                           bytes_accessed=bytes_accessed)

    const_map = lambda i: (0, 0)   # weights / constants stay resident in VMEM
    in_specs = [
        pl.BlockSpec((obs_dim, tile_b), lambda i: (0, i)),   # obs^T: tiled on lanes
        pl.BlockSpec((h0_dim, obs_dim), const_map),
        pl.BlockSpec((h1_dim, h0_dim), const_map),
        pl.BlockSpec((act_dim, h1_dim), const_map),
        pl.BlockSpec((consts.shape[0], 1), const_map),
    ]
    out_spec = pl.BlockSpec((act_dim, tile_b), lambda i: (0, i))

    kernel = functools.partial(actor_kernel, offs=tuple(offs),
                               dims=(h0_dim, h1_dim, act_dim))

    outT = pl.pallas_call(
        kernel,
        out_shape=jax.ShapeDtypeStruct((act_dim, B_pad), jnp.float32),
        grid=grid,
        in_specs=in_specs,
        out_specs=out_spec,
        compiler_params=pltpu.CompilerParams(
            dimension_semantics=("parallel",)),
        cost_estimate=cost,
    )(xT, w0_t, w1_t, w2_t, consts)

    # un-transpose + drop batch padding (layout plumbing in the wrapper)
    return outT[:, :B].T


def init_linear(key, fan_in, fan_out):
    """Mimic PyTorch nn.Linear default init: U(-1/sqrt(fan_in), 1/sqrt(fan_in))."""
    kw, kb = jax.random.split(key)
    bound = 1.0 / math.sqrt(fan_in)
    w = jax.random.uniform(kw, (fan_in, fan_out), jnp.float32, -bound, bound)
    b = jax.random.uniform(kb, (1, fan_out), jnp.float32, -bound, bound)
    return w, b


def reference_forward(obs, params, low, high):
    (w0, b0), (w1, b1), (w2, b2) = params
    h = jnp.maximum(obs @ w0 + b0, 0.0)
    h = jnp.maximum(h @ w1 + b1, 0.0)
    a = jnp.tanh(h @ w2 + b2)
    a = jnp.clip(a, -1.0, 1.0)
    return low + (a + 1.0) * 0.5 * (high - low)


if __name__ == "__main__":
    # small shapes consistent with the module
    obs_dim = 16
    hidden_sizes = (32, 32)
    act_dim = 4

    key = jax.random.PRNGKey(0)
    k_obs, k_obs2, k0, k1, k2 = jax.random.split(key, 5)

    params = [
        init_linear(k0, obs_dim, hidden_sizes[0]),
        init_linear(k1, hidden_sizes[0], hidden_sizes[1]),
        init_linear(k2, hidden_sizes[1], act_dim),
    ]

    # synthetic action space bounds (ac_space.low / ac_space.high)
    low = jnp.full((1, act_dim), -2.0, jnp.float32)
    high = jnp.full((1, act_dim), 2.0, jnp.float32)

    # --- case 1: tiny batch (single grid step, padded to one 128-lane tile) ---
    batch = 8
    obs = jax.random.normal(k_obs, (batch, obs_dim), jnp.float32)
    ref = reference_forward(obs, params, low, high)

    out_f32 = mlp_actor_forward(obs, params, low, high,
                                compute_dtype=jnp.float32)
    out_f32 = jax.block_until_ready(out_f32)
    assert out_f32.shape == (batch, act_dim)
    assert jnp.allclose(out_f32, ref, atol=1e-5, rtol=1e-5)

    # bf16 matmul-input path (opt-in): HBM-bandwidth/MXU-native, loose tolerance.
    out_bf16 = mlp_actor_forward(obs, params, low, high,
                                 compute_dtype=jnp.bfloat16)
    out_bf16 = jax.block_until_ready(out_bf16)
    assert out_bf16.shape == (batch, act_dim)
    assert jnp.allclose(out_bf16, ref, atol=5e-2, rtol=5e-2)

    # --- case 2: batch not a tile multiple (multi-step grid + tail padding) ---
    batch2 = 300
    obs2 = jax.random.normal(k_obs2, (batch2, obs_dim), jnp.float32)
    ref2 = reference_forward(obs2, params, low, high)
    out2 = mlp_actor_forward(obs2, params, low, high,
                             compute_dtype=jnp.float32)
    out2 = jax.block_until_ready(out2)
    assert out2.shape == (batch2, act_dim)
    assert jnp.allclose(out2, ref2, atol=1e-5, rtol=1e-5)

    print("KERNEL_OK")
</pallas_src>

<mosaic_0001>
module attributes {stable_mosaic.version = 11 : i64} {
  func.func @actor_kernel(%arg0: i32, %arg1: memref<16x128xf32, #tpu.memory_space<vmem>>, %arg2: memref<32x16xf32, #tpu.memory_space<vmem>>, %arg3: memref<32x32xf32, #tpu.memory_space<vmem>>, %arg4: memref<4x32xf32, #tpu.memory_space<vmem>>, %arg5: memref<88x1xf32, #tpu.memory_space<vmem>>, %arg6: memref<4x128xf32, #tpu.memory_space<vmem>>) attributes {dimension_semantics = [#tpu.dimension_semantics<parallel>], iteration_bounds = array<i64: 1>, scalar_prefetch = 0 : i64, scratch_operands = 0 : i64, tpu.core_type = #tpu.core_type<tc>, window_params = [{transform_indices = @transform_0, window_bounds = array<i64: 16, 128>}, {pipeline_mode = #tpu.pipeline_mode<synchronous>, transform_indices = @transform_1, window_bounds = array<i64: 32, 16>}, {pipeline_mode = #tpu.pipeline_mode<synchronous>, transform_indices = @transform_2, window_bounds = array<i64: 32, 32>}, {pipeline_mode = #tpu.pipeline_mode<synchronous>, transform_indices = @transform_3, window_bounds = array<i64: 4, 32>}, {pipeline_mode = #tpu.pipeline_mode<synchronous>, transform_indices = @transform_4, window_bounds = array<i64: 88, 1>}, {transform_indices = @transform_5, window_bounds = array<i64: 4, 128>}]} {
    %c0 = arith.constant 0 : index
    %c0_0 = arith.constant 0 : index
    %0 = vector.load %arg1[%c0, %c0_0] : memref<16x128xf32, #tpu.memory_space<vmem>>, vector<16x128xf32>
    %c0_1 = arith.constant 0 : index
    %c0_2 = arith.constant 0 : index
    %1 = vector.load %arg5[%c0_1, %c0_2] : memref<88x1xf32, #tpu.memory_space<vmem>>, vector<32x1xf32>
    %c32 = arith.constant 32 : index
    %c0_3 = arith.constant 0 : index
    %2 = vector.load %arg5[%c32, %c0_3] : memref<88x1xf32, #tpu.memory_space<vmem>>, vector<32x1xf32>
    %c64 = arith.constant 64 : index
    %c0_4 = arith.constant 0 : index
    %3 = vector.load %arg5[%c64, %c0_4] : memref<88x1xf32, #tpu.memory_space<vmem>>, vector<4x1xf32>
    %c72 = arith.constant 72 : index
    %c0_5 = arith.constant 0 : index
    %4 = vector.load %arg5[%c72, %c0_5] : memref<88x1xf32, #tpu.memory_space<vmem>>, vector<4x1xf32>
    %c80 = arith.constant 80 : index
    %c0_6 = arith.constant 0 : index
    %5 = vector.load %arg5[%c80, %c0_6] : memref<88x1xf32, #tpu.memory_space<vmem>>, vector<4x1xf32>
    %c0_7 = arith.constant 0 : index
    %c0_8 = arith.constant 0 : index
    %6 = vector.load %arg2[%c0_7, %c0_8] : memref<32x16xf32, #tpu.memory_space<vmem>>, vector<32x16xf32>
    %cst = arith.constant dense<0.000000e+00> : vector<32x128xf32>
    %7 = tpu.matmul %6, %0, %cst {dimension_numbers = #tpu.dot_dimension_numbers<[1], [0], [0], [1], [0, 0, 1, 1], [], []>} : vector<32x16xf32>, vector<16x128xf32>, vector<32x128xf32> -> vector<32x128xf32>
    %8 = vector.broadcast %1 : vector<32x1xf32> to vector<32x128xf32>
    %9 = arith.addf %7, %8 : vector<32x128xf32>
    %cst_9 = arith.constant 0.000000e+00 : f32
    %10 = vector.broadcast %cst_9 : f32 to vector<32x128xf32>
    %11 = arith.maximumf %9, %10 : vector<32x128xf32>
    %c0_10 = arith.constant 0 : index
    %c0_11 = arith.constant 0 : index
    %12 = vector.load %arg3[%c0_10, %c0_11] : memref<32x32xf32, #tpu.memory_space<vmem>>, vector<32x32xf32>
    %cst_12 = arith.constant dense<0.000000e+00> : vector<32x128xf32>
    %13 = tpu.matmul %12, %11, %cst_12 {dimension_numbers = #tpu.dot_dimension_numbers<[1], [0], [0], [1], [0, 0, 1, 1], [], []>} : vector<32x32xf32>, vector<32x128xf32>, vector<32x128xf32> -> vector<32x128xf32>
    %14 = vector.broadcast %2 : vector<32x1xf32> to vector<32x128xf32>
    %15 = arith.addf %13, %14 : vector<32x128xf32>
    %cst_13 = arith.constant 0.000000e+00 : f32
    %16 = vector.broadcast %cst_13 : f32 to vector<32x128xf32>
    %17 = arith.maximumf %15, %16 : vector<32x128xf32>
    %c0_14 = arith.constant 0 : index
    %c0_15 = arith.constant 0 : index
    %18 = vector.load %arg4[%c0_14, %c0_15] : memref<4x32xf32, #tpu.memory_space<vmem>>, vector<4x32xf32>
    %cst_16 = arith.constant dense<0.000000e+00> : vector<4x128xf32>
    %19 = tpu.matmul %18, %17, %cst_16 {dimension_numbers = #tpu.dot_dimension_numbers<[1], [0], [0], [1], [0, 0, 1, 1], [], []>} : vector<4x32xf32>, vector<32x128xf32>, vector<4x128xf32> -> vector<4x128xf32>
    %20 = vector.broadcast %3 : vector<4x1xf32> to vector<4x128xf32>
    %21 = arith.addf %19, %20 : vector<4x128xf32>
    %22 = math.tanh %21 : vector<4x128xf32>
    %23 = vector.broadcast %4 : vector<4x1xf32> to vector<4x128xf32>
    %24 = arith.mulf %22, %23 : vector<4x128xf32>
    %25 = vector.broadcast %5 : vector<4x1xf32> to vector<4x128xf32>
    %26 = arith.addf %24, %25 : vector<4x128xf32>
    %c0_17 = arith.constant 0 : index
    %c0_18 = arith.constant 0 : index
    %27 = vector.load %arg6[%c0_17, %c0_18] : memref<4x128xf32, #tpu.memory_space<vmem>>, vector<4x128xf32>
    tpu.vector_store %arg6[%c0_17, %c0_18], %26 {strides = array<i32>} : memref<4x128xf32, #tpu.memory_space<vmem>>, vector<4x128xf32>,
    return
  }
  func.func @transform_0(%arg0: i32) -> (i32, i32) {
    %c0_i32 = arith.constant 0 : i32
    %c0_i32_0 = arith.constant 0 : i32
    return %c0_i32, %arg0 : i32, i32
  }
  func.func @transform_1(%arg0: i32) -> (i32, i32) {
    %c0_i32 = arith.constant 0 : i32
    %c0_i32_0 = arith.constant 0 : i32
    %c0_i32_1 = arith.constant 0 : i32
    return %c0_i32, %c0_i32_0 : i32, i32
  }
  func.func @transform_2(%arg0: i32) -> (i32, i32) {
    %c0_i32 = arith.constant 0 : i32
    %c0_i32_0 = arith.constant 0 : i32
    %c0_i32_1 = arith.constant 0 : i32
    return %c0_i32, %c0_i32_0 : i32, i32
  }
  func.func @transform_3(%arg0: i32) -> (i32, i32) {
    %c0_i32 = arith.constant 0 : i32
    %c0_i32_0 = arith.constant 0 : i32
    %c0_i32_1 = arith.constant 0 : i32
    return %c0_i32, %c0_i32_0 : i32, i32
  }
  func.func @transform_4(%arg0: i32) -> (i32, i32) {
    %c0_i32 = arith.constant 0 : i32
    %c0_i32_0 = arith.constant 0 : i32
    %c0_i32_1 = arith.constant 0 : i32
    return %c0_i32, %c0_i32_0 : i32, i32
  }
  func.func @transform_5(%arg0: i32) -> (i32, i32) {
    %c0_i32 = arith.constant 0 : i32
    %c0_i32_0 = arith.constant 0 : i32
    return %c0_i32, %arg0 : i32, i32
  }
}

</mosaic_0001>

<llo_original>
// kernel: tpu_custom_call.1
$region0: #{tpu_custom_call.1}
  #allocation0 [shape = 'u32[]', space=smem, size = 0x4, offset = 0x4, fixed_abs, tag = 'smem constant byte address 0x4 - core index']
  #allocation1 [shape = 'u32[72,128]{1,0:T(1,128)}', space=vmem, size = 0x9000, scoped, tag = 'internal scratch']
  %s0 = inlined_call_operand.vmem [shape: f32[16,128], index: 0, kind: input, shape index: {}]
  %s1 = inlined_call_operand.vmem [shape: f32[32,16], index: 1, kind: input, shape index: {}]
  %s2 = inlined_call_operand.vmem [shape: f32[32,32], index: 2, kind: input, shape index: {}]
  %s3 = inlined_call_operand.vmem [shape: f32[4,32], index: 3, kind: input, shape index: {}]
  %s4 = inlined_call_operand.vmem [shape: f32[88,1], index: 4, kind: input, shape index: {}]
  %s5 = inlined_call_operand.hbm [shape: f32[4,128], index: 5, kind: output, shape index: {}]
  %s6 = sld [smem:[#allocation0]]
  $region30: #{tpu_custom_call.1} parent=0
    _
  %s8 = ssub.s32 1, %s6
  %s9 = scalar_select 0, %s8, %s6
  $region1: #{tpu_custom_call.1} parent=0
    #allocation2 [shape = 'u8[2048]{0}', space=vmem, size = 0x800, scoped, tag = 'output window, operand 0, single buffered']
    #allocation3 [shape = 's32[1]{0}', space=sflag, size = 0x4, scoped, tag = 'scoped memory for tpu_custom_call.1']
    %10 = vsyncpa [#allocation3], 0
    // Predicated region
    $region2: #{tpu_custom_call.1} parent=1 // pred_check
      _
    $region3: #{tpu_custom_call.1} parent=1 // pred_check_branch
      %12 = sbr.rel (0) target = $region5
    $region4: #{tpu_custom_call.1} parent=1 // pred_region
      _
    $region5: #{tpu_custom_call.1} parent=1 // pred_fallthru
      _
    // Predicated region
    $region6: #{tpu_custom_call.1} parent=1 // pred_check
      _
    $region7: #{tpu_custom_call.1} parent=1 // pred_check_branch
      %14 = sbr.rel (0) target = $region9
    $region8: #{tpu_custom_call.1} parent=1 // pred_region
      _
    $region9: #{tpu_custom_call.1} parent=1 // pred_fallthru
      _
    // Predicated region
    $region10: #{tpu_custom_call.1} parent=1 // pred_check
      _
    $region11: #{tpu_custom_call.1} parent=1 // pred_check_branch
      %16 = sbr.rel (0) target = $region13
    $region12: #{tpu_custom_call.1} parent=1 // pred_region
      _
    $region13: #{tpu_custom_call.1} parent=1 // pred_fallthru
      _
    // Predicated region
    $region14: #{tpu_custom_call.1} parent=1 // pred_check
      _
    $region15: #{tpu_custom_call.1} parent=1 // pred_check_branch
      %18 = sbr.rel (0) target = $region17
    $region16: #{tpu_custom_call.1} parent=1 // pred_region
      _
    $region17: #{tpu_custom_call.1} parent=1 // pred_fallthru
      _
    // Predicated region
    $region18: #{tpu_custom_call.1} parent=1 // pred_check
      _
    $region19: #{tpu_custom_call.1} parent=1 // pred_check_branch
      %20 = sbr.rel (0) target = $region21
    $region20: #{tpu_custom_call.1} parent=1 // pred_region
      _
    $region21: #{tpu_custom_call.1} parent=1 // pred_fallthru
      _
    %v21 = vld [vmem:[%s0] sm:$0xff]
    %v22 = vld [vmem:[%s0 + $0x8] sm:$0xff]
    %v23 = vld [vmem:[%s4] sm:$0xff]
    %v24 = vld [vmem:[%s4 + $0x8] sm:$0xff]
    %v25 = vld [vmem:[%s4 + $0x10] sm:$0xff]
    %v26 = vld [vmem:[%s4 + $0x18] sm:$0xff]
    %v27 = vld [vmem:[%s4 + $0x20] sm:$0xff]
    %v28 = vld [vmem:[%s4 + $0x28] sm:$0xff]
    %v29 = vld [vmem:[%s4 + $0x30] sm:$0xff]
    %v30 = vld [vmem:[%s4 + $0x38] sm:$0xff]
    %v31 = vld [vmem:[%s4 + $0x40] sm:$0xf]
    %v32 = vld [vmem:[%s4 + $0x48] sm:$0xf]
    %v33 = vld [vmem:[%s4 + $0x50] sm:$0xf]
    %v34 = vld [vmem:[%s1] sm:$0xff]
    %v35 = vld [vmem:[%s1 + $0x8] sm:$0xff]
    %v36 = vld [vmem:[%s1 + $0x10] sm:$0xff]
    %v37 = vld [vmem:[%s1 + $0x18] sm:$0xff]
    %39 = vset.pattern.permute.xlu0 0
    %40 = vperm.xlu0 %39, %v23
    %v41 = vpop.permute.xlu0 %40
    %44 = vset.pattern.permute.xlu0 0
    %45 = vperm.xlu0 %44, %v24
    %v46 = vpop.permute.xlu0 %45
    %49 = vset.pattern.permute.xlu0 0
    %50 = vperm.xlu0 %49, %v25
    %v51 = vpop.permute.xlu0 %50
    %54 = vset.pattern.permute.xlu0 0
    %55 = vperm.xlu0 %54, %v26
    %v56 = vpop.permute.xlu0 %55
    %vm58 = vcmask 130048
    %v60 = vsel %vm58, %v34, 0
    %v63 = vsel %vm58, %v35, 0
    %v66 = vsel %vm58, %v36, 0
    %v69 = vsel %vm58, %v37, 0
    %71 = vmatpush.msra.mxu0 0.0
    %72 = vmatpush.msra.mxu0 0.0
    %73 = vmatpush.msra.mxu0 0.0
    %74 = vmatpush.msra.mxu0 0.0
    %75 = vmatpush.msra.mxu0 0.0
    %76 = vmatpush.msra.mxu0 0.0
    %77 = vmatpush.msra.mxu0 0.0
    %78 = vmatpush.msra.mxu0 0.0
    %79 = vmatpush.msra.mxu0 0.0
    %80 = vmatpush.msra.mxu0 0.0
    %81 = vmatpush.msra.mxu0 0.0
    %82 = vmatpush.msra.mxu0 0.0
    %83 = vmatpush.msra.mxu0 0.0
    %84 = vmatpush.msra.mxu0 0.0
    %85 = vmatpush.msra.mxu0 %v22
    %86 = vmatpush.msra.mxu0 %v21
    %87 = vmatmul.f32.gmra.mxu0 %v60
    %v88 = vpop.f32.mrf.mxu0
    %v89 = vadd.f32 %v41, %v88
    %90 = vmatmul.f32.gmra.mxu0 %v63
    %v91 = vpop.f32.mrf.mxu0
    %v92 = vadd.f32 %v46, %v91
    %93 = vmatmul.f32.gmra.mxu0 %v66
    %v94 = vpop.f32.mrf.mxu0
    %v95 = vadd.f32 %v51, %v94
    %96 = vmatmul.f32.gmra.mxu0 %v69
    %v97 = vpop.f32.mrf.mxu0
    %v98 = vadd.f32 %v56, %v97
    %99 = vdwg.mxu0
    %v100 = vmax.f32 %v89, 0.0
    %v101 = vmax.f32 %v92, 0.0
    %v102 = vmax.f32 %v95, 0.0
    %v103 = vmax.f32 %v98, 0.0
    %v104 = vld [vmem:[%s2] sm:$0xff]
    %v105 = vld [vmem:[%s2 + $0x8] sm:$0xff]
    %v106 = vld [vmem:[%s2 + $0x10] sm:$0xff]
    %v107 = vld [vmem:[%s2 + $0x18] sm:$0xff]
    %109 = vset.pattern.permute.xlu0 0
    %110 = vperm.xlu0 %109, %v27
    %v111 = vpop.permute.xlu0 %110
    %114 = vset.pattern.permute.xlu0 0
    %115 = vperm.xlu0 %114, %v28
    %v116 = vpop.permute.xlu0 %115
    %119 = vset.pattern.permute.xlu0 0
    %120 = vperm.xlu0 %119, %v29
    %v121 = vpop.permute.xlu0 %120
    %124 = vset.pattern.permute.xlu0 0
    %125 = vperm.xlu0 %124, %v30
    %v126 = vpop.permute.xlu0 %125
    %vm128 = vcmask 261120
    %v130 = vsel %vm128, %v104, 0
    %v133 = vsel %vm128, %v105, 0
    %v136 = vsel %vm128, %v106, 0
    %v139 = vsel %vm128, %v107, 0
    %141 = vmatpush.msra.mxu0 0.0
    %142 = vmatpush.msra.mxu0 0.0
    %143 = vmatpush.msra.mxu0 0.0
    %144 = vmatpush.msra.mxu0 0.0
    %145 = vmatpush.msra.mxu0 0.0
    %146 = vmatpush.msra.mxu0 0.0
    %147 = vmatpush.msra.mxu0 0.0
    %148 = vmatpush.msra.mxu0 0.0
    %149 = vmatpush.msra.mxu0 0.0
    %150 = vmatpush.msra.mxu0 0.0
    %151 = vmatpush.msra.mxu0 0.0
    %152 = vmatpush.msra.mxu0 0.0
    %153 = vmatpush.msra.mxu0 %v103
    %154 = vmatpush.msra.mxu0 %v102
    %155 = vmatpush.msra.mxu0 %v101
    %156 = vmatpush.msra.mxu0 %v100
    %157 = vmatmul.f32.gmra.mxu0 %v130
    %v158 = vpop.f32.mrf.mxu0
    %v159 = vadd.f32 %v111, %v158
    %160 = vmatmul.f32.gmra.mxu0 %v133
    %v161 = vpop.f32.mrf.mxu0
    %v162 = vadd.f32 %v116, %v161
    %163 = vmatmul.f32.gmra.mxu0 %v136
    %v164 = vpop.f32.mrf.mxu0
    %v165 = vadd.f32 %v121, %v164
    %166 = vmatmul.f32.gmra.mxu0 %v139
    %v167 = vpop.f32.mrf.mxu0
    %v168 = vadd.f32 %v126, %v167
    %169 = vdwg.mxu0
    %v170 = vmax.f32 %v159, 0.0
    %v171 = vmax.f32 %v162, 0.0
    %v172 = vmax.f32 %v165, 0.0
    %v173 = vmax.f32 %v168, 0.0
    %v174 = vld [vmem:[%s3] sm:$0xf]
    %176 = vset.pattern.permute.xlu0 0
    %177 = vperm.xlu0 %176, %v31
    %v178 = vpop.permute.xlu0 %177
    %v181 = vsel %vm128, %v174, 0
    %183 = vmatpush.msra.mxu0 0.0
    %184 = vmatpush.msra.mxu0 0.0
    %185 = vmatpush.msra.mxu0 0.0
    %186 = vmatpush.msra.mxu0 0.0
    %187 = vmatpush.msra.mxu0 0.0
    %188 = vmatpush.msra.mxu0 0.0
    %189 = vmatpush.msra.mxu0 0.0
    %190 = vmatpush.msra.mxu0 0.0
    %191 = vmatpush.msra.mxu0 0.0
    %192 = vmatpush.msra.mxu0 0.0
    %193 = vmatpush.msra.mxu0 0.0
    %194 = vmatpush.msra.mxu0 0.0
    %195 = vmatpush.msra.mxu0 %v173
    %196 = vmatpush.msra.mxu0 %v172
    %197 = vmatpush.msra.mxu0 %v171
    %198 = vmatpush.msra.mxu0 %v170
    %199 = vmatmul.f32.gmra.mxu0 %v181
    %v200 = vpop.f32.mrf.mxu0
    %v201 = vadd.f32 %v178, %v200
    %202 = vdwg.mxu0
    %v203 = vtanh.pop %v201
    %205 = vset.pattern.permute.xlu0 0
    %206 = vperm.xlu0 %205, %v32
    %v207 = vpop.permute.xlu0 %206
    %v209 = vmul.f32 %v203, %v207
    %211 = vset.pattern.permute.xlu0 0
    %212 = vperm.xlu0 %211, %v33
    %v213 = vpop.permute.xlu0 %212
    %v215 = vadd.f32 %v209, %v213
    %216 = vst [vmem:[#allocation2] sm:$0xf] %v215
    // Predicated region
    $region22: #{tpu_custom_call.1} parent=1 // pred_check
      _
    $region23: #{tpu_custom_call.1} parent=1 // pred_check_branch
      %218 = sbr.rel (0) target = $region25
    $region24: #{tpu_custom_call.1} parent=1 // pred_region
      %220 = vsyncadd [#allocation3], 0
      %s222 = sshll.u32 [#allocation2], 4
      %s223 = int_to_ptr.vmem [resolvable:$true] %s222
      %s224 = sshll.u32 %s5, 4
      %s225 = int_to_ptr.hbm [resolvable:$true] %s224
      %227 = dma.vmem_to_hbm [thread:$0]  %s223, 64, %s225, [#allocation3]
    $region25: #{tpu_custom_call.1} parent=1 // pred_fallthru
      _
    // Predicated region
    $region26: #{tpu_custom_call.1} parent=1 // pred_check
      _
    $region27: #{tpu_custom_call.1} parent=1 // pred_check_branch
      %229 = sbr.rel (0) target = $region29
    $region28: #{tpu_custom_call.1} parent=1 // pred_region
      %231 = dma.done [#allocation3], 64
    $region29: #{tpu_custom_call.1} parent=1 // pred_fallthru
      _
    %232 = vsyncpa [#allocation3], 1

</llo_original>
